<compile_context>
chip_gen: v7x
topology: tpu7x:2x2x1
jax: 0.10.0
libtpu: 0.0.40
codegen_flags: <defaults>
</compile_context>

<pallas_src>
import jax
import jax.numpy as jnp
from jax.experimental import pallas as pl
from jax.experimental.pallas import tpu as pltpu


def _round_up(x, m):
    return ((x + m - 1) // m) * m


# ----------------------------------------------------------------------------
# Pallas kernels
# ----------------------------------------------------------------------------
def _weighted_ce_kernel(logits_ref, tc_ref, w_ref, num_ref, den_ref):
    """Weighted NLL partial sums (F.cross_entropy w/ class weights, 'mean').

    logits_ref : [TN, Cpad] raw class logits (padded classes = -1e30)
    tc_ref     : [TN, 1]    int32 target class index (padded rows point at a
                            zero-weight padded class)
    w_ref      : [1, Cpad]  per-class weight (padded classes = 0)
    num_ref    : [1,1,128]  tile partial  sum_i w[y_i] * nll_i  (broadcast)
    den_ref    : [1,1,128]  tile partial  sum_i w[y_i]          (broadcast)
    """
    x = logits_ref[...].astype(jnp.float32)                     # [TN, Cpad]
    tc = tc_ref[...]                                            # [TN, 1]
    onehot = (jax.lax.broadcasted_iota(jnp.int32, x.shape, 1) == tc
              ).astype(jnp.float32)                             # [TN, Cpad]

    m = jnp.max(x, axis=-1, keepdims=True)
    lse = m + jnp.log(jnp.sum(jnp.exp(x - m), axis=-1, keepdims=True))
    sel = jnp.sum(onehot * x, axis=-1, keepdims=True)
    nll = lse - sel                                             # [TN, 1]
    w = jnp.sum(onehot * w_ref[...], axis=-1, keepdims=True)    # [TN, 1]

    num = jnp.sum(w * nll)
    den = jnp.sum(w)
    num_ref[...] = jnp.broadcast_to(num, num_ref.shape)
    den_ref[...] = jnp.broadcast_to(den, den_ref.shape)


def weighted_cross_entropy(logits_2d, target_idx, class_weight, *, row_tile=512):
    """loss_ce = sum_i w[y_i]*nll_i / sum_i w[y_i] over all rows."""
    N, C1 = logits_2d.shape
    Cpad = _round_up(C1, 128)
    TN = min(row_tile, _round_up(N, 8))
    Npad = _round_up(N, TN)
    if Npad > N and Cpad == C1:
        # need at least one zero-weight padded class for the padded rows
        Cpad += 128

    logits_pad = jnp.full((Npad, Cpad), -1e30, jnp.float32)
    logits_pad = logits_pad.at[:N, :C1].set(logits_2d.astype(jnp.float32))
    tc_pad = jnp.full((Npad, 1), Cpad - 1, jnp.int32)
    tc_pad = tc_pad.at[:N, 0].set(target_idx.astype(jnp.int32))
    w_pad = jnp.zeros((1, Cpad), jnp.float32)
    w_pad = w_pad.at[0, :C1].set(class_weight.astype(jnp.float32))

    G = Npad // TN
    num, den = pl.pallas_call(
        _weighted_ce_kernel,
        out_shape=(
            jax.ShapeDtypeStruct((G, 1, 128), jnp.float32),
            jax.ShapeDtypeStruct((G, 1, 128), jnp.float32),
        ),
        grid=(G,),
        in_specs=[
            pl.BlockSpec((TN, Cpad), lambda i: (i, 0)),
            pl.BlockSpec((TN, 1), lambda i: (i, 0)),
            pl.BlockSpec((1, Cpad), lambda i: (0, 0)),
        ],
        out_specs=(
            pl.BlockSpec((1, 1, 128), lambda i: (i, 0, 0)),
            pl.BlockSpec((1, 1, 128), lambda i: (i, 0, 0)),
        ),
        compiler_params=pltpu.CompilerParams(
            dimension_semantics=("parallel",),
            vmem_limit_bytes=32 * 1024 * 1024,
        ),
    )(logits_pad, tc_pad, w_pad)
    return jnp.sum(num[:, 0, 0]) / jnp.sum(den[:, 0, 0])


def _mask_loss_kernel(x_ref, y_ref, valid_ref, ce_ref, dice_ref):
    """sigmoid_ce_loss + dice_loss partial sums over point-sampled logits.

    x_ref     : [TR, P] mask logits at sampled points
    y_ref     : [TR, P] binary labels at sampled points
    valid_ref : [TR, 1] 1.0 for real rows, 0.0 for padded rows
    ce_ref    : [1,1,128] tile partial  sum_rows mean_points BCE
    dice_ref  : [1,1,128] tile partial  sum_rows dice loss
    """
    x = x_ref[...].astype(jnp.float32)
    y = y_ref[...].astype(jnp.float32)
    v = valid_ref[...]                                          # [TR, 1]
    inv_p = jnp.float32(1.0 / x.shape[1])

    # share exp(-|x|) between the BCE log-term and the sigmoid
    t = jnp.exp(-jnp.abs(x))
    bce = jnp.maximum(x, 0.0) - x * y + jnp.log1p(t)
    ce_rows = jnp.sum(bce, axis=1, keepdims=True) * inv_p       # [TR, 1]

    r = pl.reciprocal(1.0 + t, approx=True)
    s = jnp.where(x >= 0.0, r, t * r)                           # sigmoid(x)
    numerator = 2.0 * jnp.sum(s * y, axis=1, keepdims=True)
    denominator = jnp.sum(s, axis=1, keepdims=True) + jnp.sum(y, axis=1,
                                                              keepdims=True)
    dice_rows = 1.0 - (numerator + 1.0) / (denominator + 1.0)   # [TR, 1]

    ce = jnp.sum(ce_rows * v)
    dice = jnp.sum(dice_rows * v)
    ce_ref[...] = jnp.broadcast_to(ce, ce_ref.shape)
    dice_ref[...] = jnp.broadcast_to(dice, dice_ref.shape)


def mask_point_losses(point_logits, point_labels, *,
                      max_block_bytes=2 * 1024 * 1024):
    Nm, P = point_logits.shape
    bytes_per_row = P * 4
    max_rows = max(8, (max_block_bytes // bytes_per_row) // 8 * 8)
    TR = min(max_rows, _round_up(Nm, 8))
    Nm_pad = _round_up(Nm, TR)
    G = Nm_pad // TR

    x = jnp.zeros((Nm_pad, P), jnp.float32
                  ).at[:Nm].set(point_logits.astype(jnp.float32))
    y = jnp.zeros((Nm_pad, P), jnp.float32
                  ).at[:Nm].set(point_labels.astype(jnp.float32))
    v = jnp.zeros((Nm_pad, 1), jnp.float32).at[:Nm].set(1.0)

    ce, dice = pl.pallas_call(
        _mask_loss_kernel,
        out_shape=(
            jax.ShapeDtypeStruct((G, 1, 128), jnp.float32),
            jax.ShapeDtypeStruct((G, 1, 128), jnp.float32),
        ),
        grid=(G,),
        in_specs=[
            pl.BlockSpec((TR, P), lambda i: (i, 0)),
            pl.BlockSpec((TR, P), lambda i: (i, 0)),
            pl.BlockSpec((TR, 1), lambda i: (i, 0)),
        ],
        out_specs=(
            pl.BlockSpec((1, 1, 128), lambda i: (i, 0, 0)),
            pl.BlockSpec((1, 1, 128), lambda i: (i, 0, 0)),
        ),
        compiler_params=pltpu.CompilerParams(
            dimension_semantics=("parallel",),
            vmem_limit_bytes=32 * 1024 * 1024,
        ),
    )(x, y, v)
    return jnp.sum(ce[:, 0, 0]), jnp.sum(dice[:, 0, 0])


# ----------------------------------------------------------------------------
# JAX glue (point sampling, index plumbing)
# ----------------------------------------------------------------------------
def _bilinear_setup(coords, H, W):
    """Shared bilinear gather indices & weights (grid_sample, align=False,
    zeros padding).  coords[...,0]=x (width), coords[...,1]=y in [0,1]."""
    x = coords[..., 0] * W - 0.5
    y = coords[..., 1] * H - 0.5
    x0 = jnp.floor(x)
    y0 = jnp.floor(y)
    x1 = x0 + 1.0
    y1 = y0 + 1.0
    wx1 = x - x0
    wx0 = 1.0 - wx1
    wy1 = y - y0
    wy0 = 1.0 - wy1
    corners = []
    for xi, yi, wgt in ((x0, y0, wx0 * wy0), (x1, y0, wx1 * wy0),
                        (x0, y1, wx0 * wy1), (x1, y1, wx1 * wy1)):
        valid = ((xi >= 0) & (xi <= W - 1) & (yi >= 0) & (yi <= H - 1)
                 ).astype(jnp.float32)
        xi_c = jnp.clip(xi, 0, W - 1).astype(jnp.int32)
        yi_c = jnp.clip(yi, 0, H - 1).astype(jnp.int32)
        corners.append((yi_c * W + xi_c, wgt * valid))
    return corners


def point_sample_shared(images, coords):
    """Bilinear-sample several [N,H,W] images at the SAME coords [N,P,2].
    Indices / weights are computed once and reused for every image."""
    N, H, W = images[0].shape
    corners = _bilinear_setup(coords, H, W)
    outs = []
    for img in images:
        flat = img.reshape(N, H * W).astype(jnp.float32)
        acc = jnp.zeros(coords.shape[:-1], jnp.float32)
        for idx, wgt in corners:
            acc = acc + jnp.take_along_axis(flat, idx, axis=1) * wgt
        outs.append(acc)
    return outs


def sample_points_for_mask_loss(src_masks, tgt_masks, num_points,
                                oversample_ratio, importance_sample_ratio,
                                key):
    """Deterministic (fixed key) replica of the detectron2 point sampler
    (uncertainty = -|logit|), fused so that src / target share gather indices
    and the importance-sampled subset reuses already-sampled logits."""
    # TODO(synk): original sampler uses torch's global RNG; here it is
    # deterministic via an explicit PRNG key.
    Nm = src_masks.shape[0]
    num_sampled = int(num_points * oversample_ratio)
    num_uncertain = int(importance_sample_ratio * num_points)
    num_random = num_points - num_uncertain
    k1, k2 = jax.random.split(key)

    over_coords = jax.random.uniform(k1, (Nm, num_sampled, 2), jnp.float32)
    (over_logits,) = point_sample_shared([src_masks], over_coords)   # [Nm,S]
    uncertainty = -jnp.abs(over_logits)                              # calc_uncertainty
    idx = jnp.argsort(-uncertainty, axis=1)[:, :num_uncertain]       # top-k
    certain_coords = jnp.take_along_axis(over_coords, idx[..., None], axis=1)
    certain_logits = jnp.take_along_axis(over_logits, idx, axis=1)   # reuse
    (certain_labels,) = point_sample_shared([tgt_masks], certain_coords)

    if num_random > 0:
        rand_coords = jax.random.uniform(k2, (Nm, num_random, 2), jnp.float32)
        rand_logits, rand_labels = point_sample_shared(
            [src_masks, tgt_masks], rand_coords)
        point_logits = jnp.concatenate([certain_logits, rand_logits], axis=1)
        point_labels = jnp.concatenate([certain_labels, rand_labels], axis=1)
    else:
        point_logits, point_labels = certain_logits, certain_labels
    return point_logits, point_labels


class VideoSetCriterionPallas:
    """JAX/Pallas port of VideoSetCriterion_ forward (labels + masks losses)."""

    def __init__(self, num_classes, eos_coef, losses, num_points,
                 oversample_ratio, importance_sample_ratio, frames=2):
        self.num_classes = num_classes
        self.eos_coef = eos_coef
        self.losses = losses
        self.num_points = num_points
        self.oversample_ratio = oversample_ratio
        self.importance_sample_ratio = importance_sample_ratio
        self.frames = frames
        # empty_weight buffer: ones(num_classes + 1), last entry = eos_coef
        self.empty_weight = jnp.ones((num_classes + 1,), jnp.float32
                                     ).at[-1].set(eos_coef)

    # --- deterministic stand-in matcher ------------------------------------
    # TODO(synk): Hungarian matching (scipy linear_sum_assignment) has no
    # clean Pallas equivalent; a deterministic identity assignment is used.
    def matcher(self, outputs, targets):
        return [(jnp.arange(len(t['labels']), dtype=jnp.int32),
                 jnp.arange(len(t['labels']), dtype=jnp.int32))
                for t in targets]

    def _get_src_permutation_idx(self, indices):
        batch_idx = jnp.concatenate(
            [jnp.full_like(src, i) for i, (src, _) in enumerate(indices)])
        src_idx = jnp.concatenate([src for src, _ in indices])
        return batch_idx, src_idx

    # --- losses -------------------------------------------------------------
    def loss_labels(self, outputs, targets, indices, num_masks):
        src_logits = outputs['pred_logits'].astype(jnp.float32)  # [B,Q,T,C+1]
        B, Q, T, C1 = src_logits.shape
        target_classes = jnp.full((B, Q, T), self.num_classes, jnp.int32)
        for b, (src, tgt) in enumerate(indices):
            labels_b = targets[b]['labels'][tgt]
            labels_b = jnp.where(labels_b == -1, self.num_classes, labels_b)
            target_classes = target_classes.at[b, src, :].set(
                jnp.broadcast_to(labels_b[:, None], (labels_b.shape[0], T)))

        logits_2d = src_logits.reshape(B * Q * T, C1)
        tc_flat = target_classes.reshape(B * Q * T)
        loss_ce = weighted_cross_entropy(logits_2d, tc_flat, self.empty_weight)
        return {'loss_ce': loss_ce}

    def loss_masks(self, outputs, targets, indices, num_masks, key):
        batch_idx, src_idx = self._get_src_permutation_idx(indices)
        pred_masks = outputs['pred_masks']                        # [B,Q,T,H,W]
        src_masks = pred_masks[batch_idx, src_idx]                # [Nm,T,H,W]
        target_masks = jnp.concatenate(
            [targets[b]['masks'][tgt] for b, (_, tgt) in enumerate(indices)],
            axis=0).astype(src_masks.dtype)                       # [Nm,T,H,W]

        Nm, T, H, W = src_masks.shape
        src_flat = src_masks.reshape(Nm, T * H, W)                # flatten(1,2)
        tgt_flat = target_masks.reshape(Nm, T * H, W)

        point_logits, point_labels = sample_points_for_mask_loss(
            src_flat, tgt_flat, self.num_points, self.oversample_ratio,
            self.importance_sample_ratio, key)

        ce_sum, dice_sum = mask_point_losses(point_logits, point_labels)
        return {'loss_mask': ce_sum / num_masks,
                'loss_dice': dice_sum / num_masks}

    # --- forward ------------------------------------------------------------
    def forward(self, outputs, targets, use_contrast=False,
                key=jax.random.PRNGKey(0)):
        # TODO(synk): aux_outputs loop and distributed all_reduce(num_masks)
        # are omitted (single-device, main outputs only), as in the prior port.
        outputs_without_aux = {k: v for k, v in outputs.items()
                               if k != 'aux_outputs'}
        indices = self.matcher(outputs_without_aux, targets)
        num_masks = sum(len(t['labels']) for t in targets)
        num_masks = max(float(num_masks), 1.0)   # get_world_size() == 1

        losses = {}
        for loss in self.losses:
            if loss == 'contrast' and not use_contrast:
                continue
            if loss == 'labels':
                losses.update(self.loss_labels(outputs, targets, indices,
                                               num_masks))
            elif loss == 'masks':
                losses.update(self.loss_masks(outputs, targets, indices,
                                              num_masks, key))
            # TODO(synk): loss_contrast (data-dependent pos/neg mining +
            # bounding boxes) is skipped (use_contrast=False path).
        return losses


# ----------------------------------------------------------------------------
# Example run
# ----------------------------------------------------------------------------
if __name__ == "__main__":
    key = jax.random.PRNGKey(0)
    B, Q, T, C, H, W = 2, 8, 2, 5, 16, 16
    n_targets = [3, 4]

    k_logits, k_masks, k_tmask, k_labels, k_pts = jax.random.split(key, 5)

    outputs = {
        'pred_logits': jax.random.normal(k_logits, (B, Q, T, C + 1),
                                         jnp.float32),
        'pred_masks': jax.random.normal(k_masks, (B, Q, T, H, W),
                                        jnp.float32),
    }

    targets = []
    tmask_keys = jax.random.split(k_tmask, B)
    label_keys = jax.random.split(k_labels, B)
    for b in range(B):
        nb = n_targets[b]
        masks = (jax.random.uniform(tmask_keys[b], (nb, T, H, W)) > 0.5
                 ).astype(jnp.float32)
        labels = jax.random.randint(label_keys[b], (nb,), 0, C,
                                    dtype=jnp.int32)
        targets.append({'labels': labels, 'masks': masks})

    criterion = VideoSetCriterionPallas(
        num_classes=C,
        eos_coef=0.1,
        losses=['labels', 'masks'],
        num_points=128,
        oversample_ratio=3.0,
        importance_sample_ratio=0.75,
        frames=T,
    )

    losses = criterion.forward(outputs, targets, use_contrast=False,
                               key=k_pts)
    losses = {k: jax.block_until_ready(v) for k, v in losses.items()}

    assert all(bool(jnp.isfinite(v)) for v in losses.values())
    print("KERNEL_OK")
</pallas_src>

<mosaic_0001>
module attributes {stable_mosaic.version = 11 : i64} {
  func.func @_weighted_ce_kernel(%arg0: i32, %arg1: memref<32x128xf32, #tpu.memory_space<vmem>>, %arg2: memref<32x1xi32, #tpu.memory_space<vmem>>, %arg3: memref<1x128xf32, #tpu.memory_space<vmem>>, %arg4: memref<1x1x128xf32, #tpu.memory_space<vmem>>, %arg5: memref<1x1x128xf32, #tpu.memory_space<vmem>>) attributes {dimension_semantics = [#tpu.dimension_semantics<parallel>], iteration_bounds = array<i64: 1>, scalar_prefetch = 0 : i64, scratch_operands = 0 : i64, tpu.core_type = #tpu.core_type<tc>, window_params = [{transform_indices = @transform_0, window_bounds = array<i64: 32, 128>}, {transform_indices = @transform_1, window_bounds = array<i64: 32, 1>}, {pipeline_mode = #tpu.pipeline_mode<synchronous>, transform_indices = @transform_2, window_bounds = array<i64: 1, 128>}, {transform_indices = @transform_3, window_bounds = array<i64: 1, 1, 128>}, {transform_indices = @transform_4, window_bounds = array<i64: 1, 1, 128>}]} {
    %c0 = arith.constant 0 : index
    %c0_0 = arith.constant 0 : index
    %0 = vector.load %arg1[%c0, %c0_0] : memref<32x128xf32, #tpu.memory_space<vmem>>, vector<32x128xf32>
    %c0_1 = arith.constant 0 : index
    %c0_2 = arith.constant 0 : index
    %1 = vector.load %arg2[%c0_1, %c0_2] : memref<32x1xi32, #tpu.memory_space<vmem>>, vector<32x1xi32>
    %2 = tpu.iota {dimensions = array<i32: 1>} : vector<32x128xi32>
    %3 = vector.broadcast %1 : vector<32x1xi32> to vector<32x128xi32>
    %4 = arith.cmpi eq, %2, %3 : vector<32x128xi32>
    %5 = arith.extui %4 : vector<32x128xi1> to vector<32x128xi32>
    %6 = arith.sitofp %5 : vector<32x128xi32> to vector<32x128xf32>
    %cst = arith.constant dense<0xFF800000> : vector<32xf32>
    %7 = vector.multi_reduction <maximumf>, %0, %cst [1] : vector<32x128xf32> to vector<32xf32>
    %8 = vector.shape_cast %7 : vector<32xf32> to vector<32x1xf32>
    %9 = vector.broadcast %8 : vector<32x1xf32> to vector<32x128xf32>
    %10 = arith.subf %0, %9 : vector<32x128xf32>
    %11 = math.exp %10 : vector<32x128xf32>
    %cst_3 = arith.constant dense<0.000000e+00> : vector<32xf32>
    %12 = vector.multi_reduction <add>, %11, %cst_3 [1] : vector<32x128xf32> to vector<32xf32>
    %13 = vector.shape_cast %12 : vector<32xf32> to vector<32x1xf32>
    %14 = math.log %13 : vector<32x1xf32>
    %15 = arith.addf %8, %14 : vector<32x1xf32>
    %16 = arith.mulf %6, %0 : vector<32x128xf32>
    %cst_4 = arith.constant dense<0.000000e+00> : vector<32xf32>
    %17 = vector.multi_reduction <add>, %16, %cst_4 [1] : vector<32x128xf32> to vector<32xf32>
    %18 = vector.shape_cast %17 : vector<32xf32> to vector<32x1xf32>
    %19 = arith.subf %15, %18 : vector<32x1xf32>
    %c0_5 = arith.constant 0 : index
    %c0_6 = arith.constant 0 : index
    %20 = vector.load %arg3[%c0_5, %c0_6] : memref<1x128xf32, #tpu.memory_space<vmem>>, vector<1x128xf32>
    %21 = vector.broadcast %20 : vector<1x128xf32> to vector<32x128xf32>
    %22 = arith.mulf %6, %21 : vector<32x128xf32>
    %cst_7 = arith.constant dense<0.000000e+00> : vector<32xf32>
    %23 = vector.multi_reduction <add>, %22, %cst_7 [1] : vector<32x128xf32> to vector<32xf32>
    %24 = vector.shape_cast %23 : vector<32xf32> to vector<32x1xf32>
    %25 = arith.mulf %24, %19 : vector<32x1xf32>
    %26 = vector.shape_cast %25 : vector<32x1xf32> to vector<1x32x1xf32>
    %cst_8 = arith.constant dense<0.000000e+00> : vector<1xf32>
    %27 = vector.multi_reduction <add>, %26, %cst_8 [1, 2] : vector<1x32x1xf32> to vector<1xf32>
    %28 = vector.shape_cast %27 : vector<1xf32> to vector<1x1x1xf32>
    %29 = vector.extract %28[0, 0, 0] : f32 from vector<1x1x1xf32>
    %30 = vector.shape_cast %24 : vector<32x1xf32> to vector<1x32x1xf32>
    %cst_9 = arith.constant dense<0.000000e+00> : vector<1xf32>
    %31 = vector.multi_reduction <add>, %30, %cst_9 [1, 2] : vector<1x32x1xf32> to vector<1xf32>
    %32 = vector.shape_cast %31 : vector<1xf32> to vector<1x1x1xf32>
    %33 = vector.extract %32[0, 0, 0] : f32 from vector<1x1x1xf32>
    %34 = vector.broadcast %29 : f32 to vector<1x1x128xf32>
    %c0_10 = arith.constant 0 : index
    %c0_11 = arith.constant 0 : index
    %c0_12 = arith.constant 0 : index
    %35 = vector.load %arg4[%c0_10, %c0_11, %c0_12] : memref<1x1x128xf32, #tpu.memory_space<vmem>>, vector<1x1x128xf32>
    tpu.vector_store %arg4[%c0_10, %c0_11, %c0_12], %34 {strides = array<i32>} : memref<1x1x128xf32, #tpu.memory_space<vmem>>, vector<1x1x128xf32>,
    %36 = vector.broadcast %33 : f32 to vector<1x1x128xf32>
    %c0_13 = arith.constant 0 : index
    %c0_14 = arith.constant 0 : index
    %c0_15 = arith.constant 0 : index
    %37 = vector.load %arg5[%c0_13, %c0_14, %c0_15] : memref<1x1x128xf32, #tpu.memory_space<vmem>>, vector<1x1x128xf32>
    tpu.vector_store %arg5[%c0_13, %c0_14, %c0_15], %36 {strides = array<i32>} : memref<1x1x128xf32, #tpu.memory_space<vmem>>, vector<1x1x128xf32>,
    return
  }
  func.func @transform_0(%arg0: i32) -> (i32, i32) {
    %c0_i32 = arith.constant 0 : i32
    %c0_i32_0 = arith.constant 0 : i32
    return %arg0, %c0_i32 : i32, i32
  }
  func.func @transform_1(%arg0: i32) -> (i32, i32) {
    %c0_i32 = arith.constant 0 : i32
    %c0_i32_0 = arith.constant 0 : i32
    return %arg0, %c0_i32 : i32, i32
  }
  func.func @transform_2(%arg0: i32) -> (i32, i32) {
    %c0_i32 = arith.constant 0 : i32
    %c0_i32_0 = arith.constant 0 : i32
    %c0_i32_1 = arith.constant 0 : i32
    return %c0_i32, %c0_i32_0 : i32, i32
  }
  func.func @transform_3(%arg0: i32) -> (i32, i32, i32) {
    %c0_i32 = arith.constant 0 : i32
    %c0_i32_0 = arith.constant 0 : i32
    %c0_i32_1 = arith.constant 0 : i32
    return %arg0, %c0_i32, %c0_i32_0 : i32, i32, i32
  }
  func.func @transform_4(%arg0: i32) -> (i32, i32, i32) {
    %c0_i32 = arith.constant 0 : i32
    %c0_i32_0 = arith.constant 0 : i32
    %c0_i32_1 = arith.constant 0 : i32
    return %arg0, %c0_i32, %c0_i32_0 : i32, i32, i32
  }
}

</mosaic_0001>

<llo_original>
// kernel: tpu_custom_call.1
$region0: #{tpu_custom_call.1}
  #allocation0 [shape = 'u32[]', space=smem, size = 0x4, offset = 0x4, fixed_abs, tag = 'smem constant byte address 0x4 - core index']
  #allocation1 [shape = 'u32[144,128]{1,0:T(1,128)}', space=vmem, size = 0x12000, scoped, tag = 'internal scratch']
  %s0 = inlined_call_operand.vmem [shape: f32[32,128], index: 0, kind: input, shape index: {}]
  %s1 = inlined_call_operand.vmem [shape: s32[32,1], index: 1, kind: input, shape index: {}]
  %s2 = inlined_call_operand.vmem [shape: f32[1,128], index: 2, kind: input, shape index: {}]
  %s3 = inlined_call_operand.hbm [shape: f32[1,1,128], index: 3, kind: output, shape index: {0}]
  %s4 = inlined_call_operand.hbm [shape: f32[1,1,128], index: 4, kind: output, shape index: {1}]
  %5 = xla_tuple %s3, %s4
  %s6 = sld [smem:[#allocation0]]
  $region30: #{tpu_custom_call.1} parent=0
    _
  %s8 = ssub.s32 1, %s6
  %s9 = scalar_select 0, %s8, %s6
  $region1: #{tpu_custom_call.1} parent=0
    #allocation2 [shape = 'u8[512]{0}', space=vmem, size = 0x400, scoped, tag = 'output window, operand 0, single buffered']
    #allocation3 [shape = 's32[1]{0}', space=sflag, size = 0x4, scoped, tag = 'scoped memory for tpu_custom_call.1']
    #allocation4 [shape = 'u8[512]{0}', space=vmem, size = 0x400, scoped, tag = 'output window, operand 1, single buffered']
    #allocation5 [shape = 's32[1]{0}', space=sflag, size = 0x4, scoped, tag = 'scoped memory for tpu_custom_call.1']
    %10 = vsyncpa [#allocation3], 0
    %11 = vsyncpa [#allocation5], 0
    // Predicated region
    $region2: #{tpu_custom_call.1} parent=1 // pred_check
      _
    $region3: #{tpu_custom_call.1} parent=1 // pred_check_branch
      %13 = sbr.rel (0) target = $region5
    $region4: #{tpu_custom_call.1} parent=1 // pred_region
      _
    $region5: #{tpu_custom_call.1} parent=1 // pred_fallthru
      _
    // Predicated region
    $region6: #{tpu_custom_call.1} parent=1 // pred_check
      _
    $region7: #{tpu_custom_call.1} parent=1 // pred_check_branch
      %15 = sbr.rel (0) target = $region9
    $region8: #{tpu_custom_call.1} parent=1 // pred_region
      _
    $region9: #{tpu_custom_call.1} parent=1 // pred_fallthru
      _
    // Predicated region
    $region10: #{tpu_custom_call.1} parent=1 // pred_check
      _
    $region11: #{tpu_custom_call.1} parent=1 // pred_check_branch
      %17 = sbr.rel (0) target = $region13
    $region12: #{tpu_custom_call.1} parent=1 // pred_region
      _
    $region13: #{tpu_custom_call.1} parent=1 // pred_fallthru
      _
    %v18 = vld [vmem:[%s0] sm:$0xff]
    %v19 = vld [vmem:[%s0 + $0x8] sm:$0xff]
    %v20 = vld [vmem:[%s0 + $0x10] sm:$0xff]
    %v21 = vld [vmem:[%s0 + $0x18] sm:$0xff]
    %v22 = vld [vmem:[%s1] sm:$0xff]
    %v23 = vld [vmem:[%s1 + $0x8] sm:$0xff]
    %v24 = vld [vmem:[%s1 + $0x10] sm:$0xff]
    %v25 = vld [vmem:[%s1 + $0x18] sm:$0xff]
    %v26 = vlaneseq
    %v27 = vand.u32 %v26, 127
    %28 = vset.pattern.permute.xlu0 0
    %29 = vperm.xlu0 %28, %v22
    %v30 = vpop.permute.xlu0 %29
    %31 = vset.pattern.permute.xlu0 0
    %32 = vperm.xlu0 %31, %v23
    %v33 = vpop.permute.xlu0 %32
    %34 = vset.pattern.permute.xlu0 0
    %35 = vperm.xlu0 %34, %v24
    %v36 = vpop.permute.xlu0 %35
    %37 = vset.pattern.permute.xlu0 0
    %38 = vperm.xlu0 %37, %v25
    %v39 = vpop.permute.xlu0 %38
    %vm40 = vcmp.eq.s32.totalorder %v27, %v30
    %vm41 = vcmp.eq.s32.totalorder %v27, %v33
    %vm42 = vcmp.eq.s32.totalorder %v27, %v36
    %vm43 = vcmp.eq.s32.totalorder %v27, %v39
    %v44 = vsel %vm40, 1, 0
    %v45 = vsel %vm41, 1, 0
    %v46 = vsel %vm42, 1, 0
    %v47 = vsel %vm43, 1, 0
    %v48 = vcvt.s32.f32 %v44
    %v49 = vcvt.s32.f32 %v45
    %v50 = vcvt.s32.f32 %v46
    %v51 = vcvt.s32.f32 %v47
    %52 = vmax.xlane.f32.xlu0 %v18
    %v53 = vpop.xlane.xlu0 %52
    %54 = vmax.xlane.f32.xlu0 %v19
    %v55 = vpop.xlane.xlu0 %54
    %56 = vmax.xlane.f32.xlu0 %v20
    %v57 = vpop.xlane.xlu0 %56
    %58 = vmax.xlane.f32.xlu0 %v21
    %v59 = vpop.xlane.xlu0 %58
    %v60 = vsub.f32 %v18, %v53
    %v61 = vsub.f32 %v19, %v55
    %v62 = vsub.f32 %v20, %v57
    %v63 = vsub.f32 %v21, %v59
    %v64 = vmul.f32 %v60, 1.442695
    %v65 = vpow.pop %v64
    %v66 = vmul.f32 %v61, 1.442695
    %v67 = vpow.pop %v66
    %v68 = vmul.f32 %v62, 1.442695
    %v69 = vpow.pop %v68
    %v70 = vmul.f32 %v63, 1.442695
    %v71 = vpow.pop %v70
    %72 = vadd.xlane.f32.xlu0 %v65
    %v73 = vpop.xlane.xlu0 %72
    %74 = vadd.xlane.f32.xlu0 %v67
    %v75 = vpop.xlane.xlu0 %74
    %76 = vadd.xlane.f32.xlu0 %v69
    %v77 = vpop.xlane.xlu0 %76
    %78 = vadd.xlane.f32.xlu0 %v71
    %v79 = vpop.xlane.xlu0 %78
    %v80 = vlog2.pop %v73
    %v81 = vmul.f32 %v80, 0.6931472
    %v82 = vlog2.pop %v75
    %v83 = vmul.f32 %v82, 0.6931472
    %v84 = vlog2.pop %v77
    %v85 = vmul.f32 %v84, 0.6931472
    %v86 = vlog2.pop %v79
    %v87 = vmul.f32 %v86, 0.6931472
    %v88 = vadd.f32 %v53, %v81
    %v89 = vadd.f32 %v55, %v83
    %v90 = vadd.f32 %v57, %v85
    %v91 = vadd.f32 %v59, %v87
    %v92 = vmul.f32 %v48, %v18
    %v93 = vmul.f32 %v49, %v19
    %v94 = vmul.f32 %v50, %v20
    %v95 = vmul.f32 %v51, %v21
    %96 = vadd.xlane.f32.xlu0 %v92
    %v97 = vpop.xlane.xlu0 %96
    %98 = vadd.xlane.f32.xlu0 %v93
    %v99 = vpop.xlane.xlu0 %98
    %100 = vadd.xlane.f32.xlu0 %v94
    %v101 = vpop.xlane.xlu0 %100
    %102 = vadd.xlane.f32.xlu0 %v95
    %v103 = vpop.xlane.xlu0 %102
    %v104 = vsub.f32 %v88, %v97
    %v105 = vsub.f32 %v89, %v99
    %v106 = vsub.f32 %v90, %v101
    %v107 = vsub.f32 %v91, %v103
    %v108 = vld [vmem:[%s2] sm:$0x1]
    %v110 = vlaneseq
    %v111 = vshrl.u32 %v110, 7
    %v112 = vsub.s32 0, %v111
    %v113 = vrot.slane %v108, %v112
    %v115 = vmul.f32 %v48, %v113
    %v116 = vmul.f32 %v49, %v113
    %v117 = vmul.f32 %v50, %v113
    %v118 = vmul.f32 %v51, %v113
    %119 = vadd.xlane.f32.xlu0 %v115
    %v120 = vpop.xlane.xlu0 %119
    %121 = vadd.xlane.f32.xlu0 %v116
    %v122 = vpop.xlane.xlu0 %121
    %123 = vadd.xlane.f32.xlu0 %v117
    %v124 = vpop.xlane.xlu0 %123
    %125 = vadd.xlane.f32.xlu0 %v118
    %v126 = vpop.xlane.xlu0 %125
    %v127 = vmul.f32 %v120, %v104
    %v128 = vmul.f32 %v122, %v105
    %v129 = vmul.f32 %v124, %v106
    %v130 = vmul.f32 %v126, %v107
    %vm131 = vcmask 7168
    %v132 = vsel %vm131, %v127, 0.0
    %v133 = vsel %vm131, %v128, 0.0
    %v134 = vadd.f32 %v132, %v133
    %v135 = vsel %vm131, %v129, 0.0
    %v136 = vadd.f32 %v134, %v135
    %v137 = vsel %vm131, %v130, 0.0
    %v138 = vadd.f32 %v136, %v137
    %139 = vadd.xlane.f32.xlu0 %v138
    %v140 = vpop.xlane.xlu0 %139
    %v141 = vrot.slane %v140, 4
    %v142 = vadd.f32 %v140, %v141
    %v143 = vrot.slane %v142, 2
    %v144 = vadd.f32 %v142, %v143
    %v145 = vrot.slane %v144, 1
    %v146 = vadd.f32 %v144, %v145
    %s147 = vtos %v146
    %v148 = vsel %vm131, %v120, 0.0
    %v149 = vsel %vm131, %v122, 0.0
    %v150 = vadd.f32 %v148, %v149
    %v151 = vsel %vm131, %v124, 0.0
    %v152 = vadd.f32 %v150, %v151
    %v153 = vsel %vm131, %v126, 0.0
    %v154 = vadd.f32 %v152, %v153
    %155 = vadd.xlane.f32.xlu0 %v154
    %v156 = vpop.xlane.xlu0 %155
    %v157 = vrot.slane %v156, 4
    %v158 = vadd.f32 %v156, %v157
    %v159 = vrot.slane %v158, 2
    %v160 = vadd.f32 %v158, %v159
    %v161 = vrot.slane %v160, 1
    %v162 = vadd.f32 %v160, %v161
    %s163 = vtos %v162
    %v164 = vstv %s147
    %165 = vst [vmem:[#allocation2] sm:$0x1] %v164
    %v166 = vstv %s163
    %167 = vst [vmem:[#allocation4] sm:$0x1] %v166
    // Predicated region
    $region14: #{tpu_custom_call.1} parent=1 // pred_check
      _
    $region15: #{tpu_custom_call.1} parent=1 // pred_check_branch
      %169 = sbr.rel (0) target = $region17
    $region16: #{tpu_custom_call.1} parent=1 // pred_region
      %s171 = ssub.s32 16, 16
      %172 = vsyncadd [#allocation3], %s171
      %s174 = sshll.u32 [#allocation2], 4
      %s175 = int_to_ptr.vmem [resolvable:$true] %s174
      %177 = dma.vmem_to_hbm [thread:$0]  %s175, 16, %s3, [#allocation3]
    $region17: #{tpu_custom_call.1} parent=1 // pred_fallthru
      _
    // Predicated region
    $region18: #{tpu_custom_call.1} parent=1 // pred_check
      _
    $region19: #{tpu_custom_call.1} parent=1 // pred_check_branch
      %179 = sbr.rel (0) target = $region21
    $region20: #{tpu_custom_call.1} parent=1 // pred_region
      %s181 = ssub.s32 16, 16
      %182 = vsyncadd [#allocation5], %s181
      %s184 = sshll.u32 [#allocation4], 4
      %s185 = int_to_ptr.vmem [resolvable:$true] %s184
      %187 = dma.vmem_to_hbm [thread:$0]  %s185, 16, %s4, [#allocation5]
    $region21: #{tpu_custom_call.1} parent=1 // pred_fallthru
      _
    // Predicated region
    $region22: #{tpu_custom_call.1} parent=1 // pred_check
      _
    $region23: #{tpu_custom_call.1} parent=1 // pred_check_branch
      %189 = sbr.rel (0) target = $region25
    $region24: #{tpu_custom_call.1} parent=1 // pred_region
      %190 = dma.done [#allocation3], 16
    $region25: #{tpu_custom_call.1} parent=1 // pred_fallthru
      _
    // Predicated region
    $region26: #{tpu_custom_call.1} parent=1 // pred_check
      _
    $region27: #{tpu_custom_call.1} parent=1 // pred_check_branch
      %192 = sbr.rel (0) target = $region29
    $region28: #{tpu_custom_call.1} parent=1 // pred_region
      %193 = dma.done [#allocation5], 16
    $region29: #{tpu_custom_call.1} parent=1 // pred_fallthru
      _
    %194 = vsyncpa [#allocation3], 1
    %195 = vsyncpa [#allocation5], 1

</llo_original>
